<compile_context>
chip_gen: v6e
topology: v6e:2x2x1
jax: 0.10.0
libtpu: 0.0.40
codegen_flags: <defaults>
</compile_context>

<pallas_src>
import jax
import jax.numpy as jnp
from jax.experimental import pallas as pl
from jax.experimental.pallas import tpu as pltpu


def _ffn_kernel(x_ref, w13_ref, w2t_ref, o_ref, acc_ref):
    # x_ref:   (tm, dim)      row tile, resident across the hidden axis
    # w13_ref: (dim, 2*th)    fused [gate | up] projection tile, (K, N) layout
    # w2t_ref: (th, dim)      down projection tile (w2^T slice), (K, N) layout
    # o_ref:   (tm, dim)      output tile (constant block across hidden axis)
    # acc_ref: (tm, dim) f32  VMEM accumulator for the down projection
    h = pl.program_id(1)
    th = w2t_ref.shape[0]

    @pl.when(h == 0)
    def _():
        acc_ref[...] = jnp.zeros_like(acc_ref)

    x = x_ref[...]
    # One fused MXU matmul produces gate and up: (tm, dim) @ (dim, 2*th).
    gu = jnp.dot(x, w13_ref[...], preferred_element_type=jnp.float32)
    gate = gu[:, :th]           # lane-boundary slices (th is a multiple of 128
    up = gu[:, th:]             # at real sizes, or the full extent)

    # SiLU(gate) * up in f32 (sigmoid runs on the EUP slot, hidden under MXU).
    act = gate * jax.nn.sigmoid(gate) * up

    # Partial down projection, natural (M,K)x(K,N) form, f32 accumulation.
    acc_ref[...] += jnp.dot(act.astype(x.dtype), w2t_ref[...],
                            preferred_element_type=jnp.float32)

    @pl.when(h == pl.num_programs(1) - 1)
    def _():
        o_ref[...] = acc_ref[...].astype(o_ref.dtype)


def _round_up(a, b):
    return (a + b - 1) // b * b


def _vmem_capacity_bytes():
    try:
        info = pltpu.get_tpu_info()
        cap = int(getattr(info, "vmem_capacity_bytes", 0) or 0)
        if cap > 0:
            return cap
    except Exception:
        pass
    return 64 << 20  # conservative fallback: v7x per-TensorCore VMEM


def _choose_tiles(M, dim, hidden, itemsize, budget, tm=None, th=None):
    """VMEM-budget-driven (tm, th).

    Prefers large tm first (arithmetic intensity ~ tm because weights are
    re-streamed from HBM once per row tile), then large th, subject to a byte
    model that includes double buffers, the f32 accumulator and the in-kernel
    f32 gate/up temporaries."""

    def vmem_bytes(tm_, th_):
        io_blocks = 2 * 2 * tm_ * dim * itemsize    # x + out blocks, double-buffered
        acc = tm_ * dim * 4                         # f32 accumulator scratch
        w_blocks = 2 * 3 * th_ * dim * itemsize     # (2*th + th)*dim weights, 2 buffers
        internals = 4 * tm_ * th_ * 4               # gu + SiLU epilogue f32 temporaries
        return io_blocks + acc + w_blocks + internals

    if th is not None:
        assert hidden % th == 0, "th must divide the hidden dim"
        th_cands = [th]
    else:
        th_cands = [t for t in (512, 384, 256, 128) if hidden % t == 0] or [hidden]

    unit = 128 if M >= 128 else 8                   # don't over-pad tiny/decode M
    m_full = _round_up(M, unit)
    if tm is not None:
        tm_cands = [_round_up(tm, unit)]
    else:
        tm_cands = []
        for c in (2048, 1024, 512, 256, 128):
            c = min(c, m_full)
            if c >= unit and c % unit == 0 and c not in tm_cands:
                tm_cands.append(c)
        if m_full not in tm_cands:
            tm_cands.append(m_full)
        tm_cands.sort(reverse=True)

    for tm_ in tm_cands:
        for th_ in th_cands:
            if vmem_bytes(tm_, th_) <= budget:
                return tm_, th_
    return tm_cands[-1], th_cands[-1]               # smallest combo; let Mosaic decide


def feed_forward(x, w1, w2, w3, *, tm=None, th=None, compute_dtype=jnp.bfloat16):
    """SwiGLU FFN with weights in their natural nn.Linear layouts.

    x:  (batch, seq, dim)
    w1: (hidden, dim)   gate projection
    w2: (dim, hidden)   down projection
    w3: (hidden, dim)   up projection

    Matmuls run in `compute_dtype` (bf16 by default) with f32 accumulation and
    an f32 SiLU epilogue; the output keeps x.dtype.
    """
    batch, seq, dim = x.shape
    hidden = w1.shape[0]
    assert w3.shape == (hidden, dim) and w2.shape == (dim, hidden)
    M = batch * seq
    itemsize = jnp.dtype(compute_dtype).itemsize
    out_itemsize = jnp.dtype(x.dtype).itemsize

    vmem_cap = _vmem_capacity_bytes()
    vmem_limit = min(int(vmem_cap * 0.85), 120 << 20)
    budget = int(vmem_cap * 0.70)                   # headroom for Mosaic's own scratch

    tm, th = _choose_tiles(M, dim, hidden, itemsize, budget, tm=tm, th=th)
    grid_h = hidden // th

    # --- one-time weight relayout (in a real model: do this once at load) ---
    # Fused gate|up weight, (grid_h, dim, 2*th): tile h = [w1_h^T | w3_h^T],
    # each a contiguous HBM slab presented to the MXU in (K, N) form.
    w1c = w1.astype(compute_dtype)
    w3c = w3.astype(compute_dtype)
    w13 = jnp.concatenate(
        [w1c.reshape(grid_h, th, dim).transpose(0, 2, 1),
         w3c.reshape(grid_h, th, dim).transpose(0, 2, 1)], axis=-1)
    # Down projection transposed to (hidden, dim): contiguous (th, dim) tiles.
    w2t = w2.T.astype(compute_dtype)

    # Pad the token axis so awkward M never degrades to sub-(8,128) row tiles.
    x2d = x.reshape(M, dim).astype(compute_dtype)
    M_pad = _round_up(M, tm)
    if M_pad != M:
        x2d = jnp.pad(x2d, ((0, M_pad - M), (0, 0)))
    grid = (M_pad // tm, grid_h)

    cost = pl.CostEstimate(
        flops=6 * M_pad * dim * hidden,             # three (M,dim,hidden) matmuls
        transcendentals=M_pad * hidden,             # sigmoid in the SiLU
        bytes_accessed=int(x2d.size * itemsize + M_pad * dim * out_itemsize
                           + grid[0] * (w13.size + w2t.size) * itemsize),
    )

    # TODO(synk): decode-shaped inputs (grid[0]==1) on v7x leave one TensorCore
    # idle; a per-core split of the hidden reduction (core_map + per-core
    # partial accumulators) would recover up to 2x there.
    out2d = pl.pallas_call(
        _ffn_kernel,
        out_shape=jax.ShapeDtypeStruct((M_pad, dim), x.dtype),
        grid_spec=pltpu.PrefetchScalarGridSpec(
            num_scalar_prefetch=0,
            grid=grid,
            in_specs=[
                # x row tile: resident across the hidden (reduction) axis.
                pl.BlockSpec((tm, dim), lambda i, h: (i, 0)),
                # Fused w1|w3 tile, contiguous per hidden tile, (K, N) layout.
                pl.BlockSpec((None, dim, 2 * th), lambda i, h: (h, 0, 0)),
                # w2^T tile, contiguous, (K, N) layout.
                pl.BlockSpec((th, dim), lambda i, h: (h, 0)),
            ],
            # Output block constant along the hidden axis -> accumulator pattern.
            out_specs=pl.BlockSpec((tm, dim), lambda i, h: (i, 0)),
            scratch_shapes=[pltpu.VMEM((tm, dim), jnp.float32)],
        ),
        compiler_params=pltpu.CompilerParams(
            dimension_semantics=("parallel", "arbitrary"),
            vmem_limit_bytes=vmem_limit,
        ),
        cost_estimate=cost,
    )(x2d, w13, w2t)

    if M_pad != M:
        out2d = out2d[:M]
    return out2d.reshape(batch, seq, dim)


def _hidden_dim(dim, multiple_of, ffn_dim_multiplier=None):
    hidden = int(4 * dim * 2 / 3)
    if ffn_dim_multiplier:
        hidden = int(hidden * ffn_dim_multiplier)
    return multiple_of * ((hidden + multiple_of - 1) // multiple_of)


if __name__ == "__main__":
    # Small ModelArgs-like config; th=128 forces 3 accumulation steps over the
    # hidden axis so the tiled reduction path is exercised even at demo size.
    batch, seq, dim, multiple_of = 2, 8, 128, 128
    hidden = _hidden_dim(dim, multiple_of)  # int(4*128*2/3)=341 -> 384

    key = jax.random.PRNGKey(0)
    kx, k1, k2, k3 = jax.random.split(key, 4)
    x = jax.random.normal(kx, (batch, seq, dim), dtype=jnp.float32)
    # nn.Linear weight shapes: w1,(hidden,dim)  w2,(dim,hidden)  w3,(hidden,dim)
    w1 = jax.random.normal(k1, (hidden, dim), dtype=jnp.float32) * 0.05
    w2 = jax.random.normal(k2, (dim, hidden), dtype=jnp.float32) * 0.05
    w3 = jax.random.normal(k3, (hidden, dim), dtype=jnp.float32) * 0.05

    out = feed_forward(x, w1, w2, w3, th=128)
    out = jax.block_until_ready(out)

    # Reference with identical numerics (bf16 compute, f32 accumulation).
    cd = jnp.bfloat16
    x2 = x.reshape(-1, dim).astype(cd)
    gate = jnp.dot(x2, w1.astype(cd).T, preferred_element_type=jnp.float32)
    up = jnp.dot(x2, w3.astype(cd).T, preferred_element_type=jnp.float32)
    act = (gate * jax.nn.sigmoid(gate) * up).astype(cd)
    ref = jnp.dot(act, w2.astype(cd).T, preferred_element_type=jnp.float32)
    ref = ref.astype(x.dtype).reshape(batch, seq, dim)

    assert out.shape == (batch, seq, dim)
    assert jnp.allclose(out, ref, atol=2e-2, rtol=2e-2), float(jnp.max(jnp.abs(out - ref)))

    print("KERNEL_OK")
</pallas_src>

<mosaic_0001>
module attributes {stable_mosaic.version = 11 : i64} {
  func.func @_ffn_kernel(%arg0: i32, %arg1: i32, %arg2: memref<16x128xbf16, #tpu.memory_space<vmem>>, %arg3: memref<1x128x256xbf16, #tpu.memory_space<vmem>>, %arg4: memref<128x128xbf16, #tpu.memory_space<vmem>>, %arg5: memref<16x128xf32, #tpu.memory_space<vmem>>, %arg6: memref<16x128xf32, #tpu.memory_space<vmem>>) attributes {dimension_semantics = [#tpu.dimension_semantics<parallel>, #tpu.dimension_semantics<arbitrary>], iteration_bounds = array<i64: 1, 3>, scalar_prefetch = 0 : i64, scratch_operands = 1 : i64, tpu.core_type = #tpu.core_type<tc>, window_params = [{transform_indices = @transform_0, window_bounds = array<i64: 16, 128>}, {transform_indices = @transform_1, window_bounds = array<i64: 1, 128, 256>}, {transform_indices = @transform_2, window_bounds = array<i64: 128, 128>}, {transform_indices = @transform_3, window_bounds = array<i64: 16, 128>}]} {
    %c0_i32 = arith.constant 0 : i32
    %0 = arith.cmpi eq, %arg1, %c0_i32 : i32
    %1 = arith.extui %0 : i1 to i32
    %c0_i32_0 = arith.constant 0 : i32
    %2 = arith.cmpi ne, %1, %c0_i32_0 : i32
    scf.if %2 {
      %cst_14 = arith.constant 0.000000e+00 : f32
      %25 = vector.broadcast %cst_14 : f32 to vector<16x128xf32>
      %c0_15 = arith.constant 0 : index
      %c0_16 = arith.constant 0 : index
      %26 = vector.load %arg6[%c0_15, %c0_16] : memref<16x128xf32, #tpu.memory_space<vmem>>, vector<16x128xf32>
      tpu.vector_store %arg6[%c0_15, %c0_16], %25 {strides = array<i32>} : memref<16x128xf32, #tpu.memory_space<vmem>>, vector<16x128xf32>,
    } else {
    }
    %c0 = arith.constant 0 : index
    %c0_1 = arith.constant 0 : index
    %3 = vector.load %arg2[%c0, %c0_1] : memref<16x128xbf16, #tpu.memory_space<vmem>>, vector<16x128xbf16>
    %c0_2 = arith.constant 0 : index
    %c0_3 = arith.constant 0 : index
    %c0_4 = arith.constant 0 : index
    %4 = vector.load %arg3[%c0_2, %c0_3, %c0_4] : memref<1x128x256xbf16, #tpu.memory_space<vmem>>, vector<1x128x256xbf16>
    %5 = vector.shape_cast %4 : vector<1x128x256xbf16> to vector<128x256xbf16>
    %cst = arith.constant dense<0.000000e+00> : vector<16x256xf32>
    %6 = tpu.matmul %3, %5, %cst {dimension_numbers = #tpu.dot_dimension_numbers<[1], [0], [0], [1], [0, 0, 1, 1], [], []>} : vector<16x128xbf16>, vector<128x256xbf16>, vector<16x256xf32> -> vector<16x256xf32>
    %7 = vector.extract_strided_slice %6 {offsets = [0, 0], sizes = [16, 128], strides = [1, 1]} : vector<16x256xf32> to vector<16x128xf32>
    %8 = vector.extract_strided_slice %6 {offsets = [0, 128], sizes = [16, 128], strides = [1, 1]} : vector<16x256xf32> to vector<16x128xf32>
    %9 = arith.negf %7 : vector<16x128xf32>
    %10 = math.exp %9 : vector<16x128xf32>
    %cst_5 = arith.constant 1.000000e+00 : f32
    %11 = vector.broadcast %cst_5 : f32 to vector<16x128xf32>
    %12 = arith.addf %11, %10 : vector<16x128xf32>
    %13 = arith.divf %11, %12 : vector<16x128xf32>
    %14 = arith.mulf %7, %13 : vector<16x128xf32>
    %15 = arith.mulf %14, %8 : vector<16x128xf32>
    %c0_6 = arith.constant 0 : index
    %c0_7 = arith.constant 0 : index
    %16 = vector.load %arg6[%c0_6, %c0_7] : memref<16x128xf32, #tpu.memory_space<vmem>>, vector<16x128xf32>
    %17 = arith.truncf %15 : vector<16x128xf32> to vector<16x128xbf16>
    %c0_8 = arith.constant 0 : index
    %c0_9 = arith.constant 0 : index
    %18 = vector.load %arg4[%c0_8, %c0_9] : memref<128x128xbf16, #tpu.memory_space<vmem>>, vector<128x128xbf16>
    %cst_10 = arith.constant dense<0.000000e+00> : vector<16x128xf32>
    %19 = tpu.matmul %17, %18, %cst_10 {dimension_numbers = #tpu.dot_dimension_numbers<[1], [0], [0], [1], [0, 0, 1, 1], [], []>} : vector<16x128xbf16>, vector<128x128xbf16>, vector<16x128xf32> -> vector<16x128xf32>
    %20 = arith.addf %16, %19 : vector<16x128xf32>
    %c0_11 = arith.constant 0 : index
    %c0_12 = arith.constant 0 : index
    %21 = vector.load %arg6[%c0_11, %c0_12] : memref<16x128xf32, #tpu.memory_space<vmem>>, vector<16x128xf32>
    tpu.vector_store %arg6[%c0_11, %c0_12], %20 {strides = array<i32>} : memref<16x128xf32, #tpu.memory_space<vmem>>, vector<16x128xf32>,
    %c2_i32 = arith.constant 2 : i32
    %22 = arith.cmpi eq, %arg1, %c2_i32 : i32
    %23 = arith.extui %22 : i1 to i32
    %c0_i32_13 = arith.constant 0 : i32
    %24 = arith.cmpi ne, %23, %c0_i32_13 : i32
    scf.if %24 {
      %c0_14 = arith.constant 0 : index
      %c0_15 = arith.constant 0 : index
      %25 = vector.load %arg6[%c0_14, %c0_15] : memref<16x128xf32, #tpu.memory_space<vmem>>, vector<16x128xf32>
      %c0_16 = arith.constant 0 : index
      %c0_17 = arith.constant 0 : index
      %26 = vector.load %arg5[%c0_16, %c0_17] : memref<16x128xf32, #tpu.memory_space<vmem>>, vector<16x128xf32>
      tpu.vector_store %arg5[%c0_16, %c0_17], %25 {strides = array<i32>} : memref<16x128xf32, #tpu.memory_space<vmem>>, vector<16x128xf32>,
    } else {
    }
    return
  }
  func.func @transform_0(%arg0: i32, %arg1: i32) -> (i32, i32) {
    %c0_i32 = arith.constant 0 : i32
    %c0_i32_0 = arith.constant 0 : i32
    return %arg0, %c0_i32 : i32, i32
  }
  func.func @transform_1(%arg0: i32, %arg1: i32) -> (i32, i32, i32) {
    %c0_i32 = arith.constant 0 : i32
    %c0_i32_0 = arith.constant 0 : i32
    %c0_i32_1 = arith.constant 0 : i32
    return %arg1, %c0_i32, %c0_i32_0 : i32, i32, i32
  }
  func.func @transform_2(%arg0: i32, %arg1: i32) -> (i32, i32) {
    %c0_i32 = arith.constant 0 : i32
    %c0_i32_0 = arith.constant 0 : i32
    return %arg1, %c0_i32 : i32, i32
  }
  func.func @transform_3(%arg0: i32, %arg1: i32) -> (i32, i32) {
    %c0_i32 = arith.constant 0 : i32
    %c0_i32_0 = arith.constant 0 : i32
    return %arg0, %c0_i32 : i32, i32
  }
}

</mosaic_0001>

<llo_original>
// kernel: tpu_custom_call.1
$region0: #{tpu_custom_call.1}
  #allocation0 [shape = 'u32[]', space=smem, size = 0x4, offset = 0x4, fixed_abs, tag = 'smem constant byte address 0x4 - core index']
  #allocation1 [shape = 'u32[144,128]{1,0:T(1,128)}', space=vmem, size = 0x12000, scoped, tag = 'internal scratch']
  #allocation2 [shape = 'f32[16,128]{1,0:T(8,128)}', space=vmem, size = 0x2000, scoped, tag = 'scratch operand']
  %s0 = inlined_call_operand.hbm [shape: bf16[16,128], index: 0, kind: input, shape index: {}]
  %s1 = inlined_call_operand.hbm [shape: bf16[3,128,256], index: 1, kind: input, shape index: {}]
  %s2 = inlined_call_operand.hbm [shape: bf16[384,128], index: 2, kind: input, shape index: {}]
  %s3 = inlined_call_operand.hbm [shape: f32[16,128], index: 3, kind: output, shape index: {}]
  %s4 = sld [smem:[#allocation0]]
  $region65: #{tpu_custom_call.1} parent=0
    _
  %s6 = ssub.s32 1, %s4
  %s7 = scalar_select 0, %s6, %s4
  $region1: #{tpu_custom_call.1} parent=0
    #allocation3 [shape = 'u8[4096]{0}', space=vmem, size = 0x1000, scoped, tag = 'input window, operand 0, single buffered']
    #allocation4 [shape = 's32[2]{0}', space=sflag, size = 0x8, scoped, tag = 'scoped memory for tpu_custom_call.1']
    #allocation5 [shape = 's32[2]{0}', space=sflag, size = 0x8, scoped, tag = 'scoped memory for tpu_custom_call.1']
    #allocation6 [shape = 'u8[131072]{0}', space=vmem, size = 0x20000, scoped, tag = 'input window, operand 1']
    #allocation7 [shape = 's32[2]{0}', space=sflag, size = 0x8, scoped, tag = 'scoped memory for tpu_custom_call.1']
    #allocation8 [shape = 'u8[65536]{0}', space=vmem, size = 0x10000, scoped, tag = 'input window, operand 2']
    #allocation9 [shape = 'u8[8192]{0}', space=vmem, size = 0x2000, scoped, tag = 'output window, operand 0, single buffered']
    %8 = vsyncpa [#allocation4], 0
    %9 = vsyncpa [#allocation7], 0
    %s10 = scalar_lea.sflag [#allocation7], 1
    %11 = vsyncpa %s10, 0
    %12 = vsyncpa [#allocation5], 0
    loop: start=0, step=1, limit=5
    $region2: #{tpu_custom_call.1} parent=1 // loop_pre_header
      _
    $region3: #{tpu_custom_call.1} parent=1 // loop_header
      %s14 = sphi 0, %s18
      %p15 = scmp.ge.s32.totalorder %s14, 5
      %s21 = sphi 0, %s33
      %s22 = sphi 0, %s29
      %s23 = sphi 0, %s21
      %s24 = sphi 0, %s22
      %s25 = sphi 0, %s23
      %s26 = sphi 0, %s24
      %s36 = sphi 0, %s38
      %s39 = sphi 0, %s36
      %s40 = sphi 0, %s39
      %s56 = sphi 0, %s40
      %s62 = sphi 0, %s64
      %s65 = sphi 0, %s62
      %s66 = sphi 0, %s65
      %s82 = sphi 0, %s66
      %s88 = sphi 0, %s90
      %s91 = sphi 0, %s88
      %s92 = sphi 0, %s91
      %s108 = sphi 0, %s92
      %s114 = sphi 0, %s116
      %s117 = sphi 0, %s114
      %s118 = sphi 0, %s117
      %s134 = sphi 0, %s118
    $region4: #{tpu_custom_call.1} parent=1 // loop_header_branch
      %17 = sbr.rel (%p15) target = $region8
    $region5: #{tpu_custom_call.1} parent=1 // loop_body
      %s19 = ssub.s32 %s14, 1
      %s20 = ssub.s32 %s14, 2
      %s27 = sadd.s32 1, %s22
      %p28 = scmp.ge.s32.totalorder %s27, 3
      %s29 = scalar_select %p28, 0, %s27
      %s30 = sadd.s32 1, %s21
      %s31 = scalar_select %p28, %s30, %s21
      %p32 = scmp.ge.s32.totalorder %s31, 1
      %s33 = scalar_select %p32, 0, %s31
      %s34 = ssub.s32 %s21, %s33
      %p35 = scmp.eq.s32.totalorder %s34, 0
      %s37 = sadd.s32 %s36, 1
      %s38 = scalar_select %p35, %s36, %s37
      %p41 = pneg %p35
      %p42 = scmp.eq.s32.totalorder %s14, 2
      %p43 = por %p41, %p42
      %p44 = scmp.ne.s32.totalorder %s36, %s39
      %p45 = scmp.eq.s32.totalorder %s14, 0
      %p46 = por %p44, %p45
      %p47 = scmp.ne.s32.totalorder %s36, %s39
      %p48 = scmp.eq.s32.totalorder %s19, 2
      %p49 = por %p47, %p48
      %p50 = scmp.ne.s32.totalorder %s39, %s40
      %p51 = scmp.eq.s32.totalorder %s19, 0
      %p52 = por %p50, %p51
      %p53 = scmp.ne.s32.totalorder %s39, %s40
      %p54 = scmp.eq.s32.totalorder %s20, 2
      %p55 = por %p53, %p54
      %p57 = scmp.ne.s32.totalorder %s40, %s56
      %p58 = scmp.eq.s32.totalorder %s20, 0
      %p59 = por %p57, %p58
      %s60 = ssub.s32 %s22, %s29
      %p61 = scmp.eq.s32.totalorder %s60, 0
      %s63 = sadd.s32 %s62, 1
      %s64 = scalar_select %p61, %s62, %s63
      %p67 = pneg %p61
      %p68 = scmp.eq.s32.totalorder %s14, 2
      %p69 = por %p67, %p68
      %p70 = scmp.ne.s32.totalorder %s62, %s65
      %p71 = scmp.eq.s32.totalorder %s14, 0
      %p72 = por %p70, %p71
      %p73 = scmp.ne.s32.totalorder %s62, %s65
      %p74 = scmp.eq.s32.totalorder %s19, 2
      %p75 = por %p73, %p74
      %p76 = scmp.ne.s32.totalorder %s65, %s66
      %p77 = scmp.eq.s32.totalorder %s19, 0
      %p78 = por %p76, %p77
      %p79 = scmp.ne.s32.totalorder %s65, %s66
      %p80 = scmp.eq.s32.totalorder %s20, 2
      %p81 = por %p79, %p80
      %p83 = scmp.ne.s32.totalorder %s66, %s82
      %p84 = scmp.eq.s32.totalorder %s20, 0
      %p85 = por %p83, %p84
      %s86 = ssub.s32 %s22, %s29
      %p87 = scmp.eq.s32.totalorder %s86, 0
      %s89 = sadd.s32 %s88, 1
      %s90 = scalar_select %p87, %s88, %s89
      %p93 = pneg %p87
      %p94 = scmp.eq.s32.totalorder %s14, 2
      %p95 = por %p93, %p94
      %p96 = scmp.ne.s32.totalorder %s88, %s91
      %p97 = scmp.eq.s32.totalorder %s14, 0
      %p98 = por %p96, %p97
      %p99 = scmp.ne.s32.totalorder %s88, %s91
      %p100 = scmp.eq.s32.totalorder %s19, 2
      %p101 = por %p99, %p100
      %p102 = scmp.ne.s32.totalorder %s91, %s92
      %p103 = scmp.eq.s32.totalorder %s19, 0
      %p104 = por %p102, %p103
      %p105 = scmp.ne.s32.totalorder %s91, %s92
      %p106 = scmp.eq.s32.totalorder %s20, 2
      %p107 = por %p105, %p106
      %p109 = scmp.ne.s32.totalorder %s92, %s108
      %p110 = scmp.eq.s32.totalorder %s20, 0
      %p111 = por %p109, %p110
      %s112 = ssub.s32 %s21, %s33
      %p113 = scmp.eq.s32.totalorder %s112, 0
      %s115 = sadd.s32 %s114, 1
      %s116 = scalar_select %p113, %s114, %s115
      %p119 = pneg %p113
      %p120 = scmp.eq.s32.totalorder %s14, 2
      %p121 = por %p119, %p120
      %p122 = scmp.ne.s32.totalorder %s114, %s117
      %p123 = scmp.eq.s32.totalorder %s14, 0
      %p124 = por %p122, %p123
      %p125 = scmp.ne.s32.totalorder %s114, %s117
      %p126 = scmp.eq.s32.totalorder %s19, 2
      %p127 = por %p125, %p126
      %p128 = scmp.ne.s32.totalorder %s117, %s118
      %p129 = scmp.eq.s32.totalorder %s19, 0
      %p130 = por %p128, %p129
      %p131 = scmp.ne.s32.totalorder %s117, %s118
      %p132 = scmp.eq.s32.totalorder %s20, 2
      %p133 = por %p131, %p132
      %p135 = scmp.ne.s32.totalorder %s118, %s134
      %p136 = scmp.eq.s32.totalorder %s20, 0
      %p137 = por %p135, %p136
      %p138 = scmp.le.s32.totalorder 1, %s14
      %p139 = scmp.lt.s32.totalorder %s14, 4
      %p140 = pnand %p138, %p139
      %p141 = pneg %p140
      // Predicated region
      $region9: #{tpu_custom_call.1} parent=5 // pred_check
        _
      $region10: #{tpu_custom_call.1} parent=5 // pred_check_branch
        %143 = sbr.rel (%p140) target = $region12
      $region11: #{tpu_custom_call.1} parent=5 // pred_region
        %s144 = ssub.s32 %s14, 1
        // Predicated region
        $region13: #{tpu_custom_call.1} parent=11 // pred_check
          %p145 = pneg %p52
        $region14: #{tpu_custom_call.1} parent=11 // pred_check_branch
          %147 = sbr.rel (%p145) target = $region16
        $region15: #{tpu_custom_call.1} parent=11 // pred_region
          %s148 = smul.u32 2, %s23
          %s150 = ssub.s32 128, 128
          %151 = vsyncadd [#allocation4], %s150
          %s152 = smul.addr %s148, 64
          %s153 = scalar_lea.hbm %s0, %s152
          %s154 = sshll.u32 [#allocation3], 4
          %s155 = int_to_ptr.vmem [resolvable:$true] %s154
          %160 = dma.hbm_to_vmem [thread:$0]  %s153, 128, %s155, [#allocation4], 64, 64, 4
        $region16: #{tpu_custom_call.1} parent=11 // pred_fallthru
          _
      $region12: #{tpu_custom_call.1} parent=5 // pred_fallthru
        _
      %p161 = scmp.lt.s32.totalorder %s14, 3
      // Predicated region
      $region17: #{tpu_custom_call.1} parent=5 // pred_check
        %p162 = pneg %p161
      $region18: #{tpu_custom_call.1} parent=5 // pred_check_branch
        %164 = sbr.rel (%p162) target = $region20
      $region19: #{tpu_custom_call.1} parent=5 // pred_region
        // Predicated region
        $region21: #{tpu_custom_call.1} parent=19 // pred_check
          %p165 = pneg %p72
        $region22: #{tpu_custom_call.1} parent=19 // pred_check_branch
          %167 = sbr.rel (%p165) target = $region24
        $region23: #{tpu_custom_call.1} parent=19 // pred_region
          %s168 = sand.u32 %s14, 1
          %s169 = scalar_lea.sflag [#allocation7], %s168
          %s170 = sand.u32 %s62, 1
          %s171 = smul.addr %s170, 128
          %s172 = scalar_lea.vmem [#allocation6], %s171
          %s174 = ssub.s32 2048, 2048
          %175 = vsyncadd %s169, %s174
          %s176 = smul.addr %s22, 32
          %s177 = smul.addr %s176, 64
          %s178 = scalar_lea.hbm %s1, %s177
          %s179 = sshll.u32 %s172, 4
          %s180 = int_to_ptr.vmem [resolvable:$true] %s179
          %185 = dma.hbm_to_vmem [thread:$0]  %s178, 2048, %s180, %s169, 128, 128, 8
        $region24: #{tpu_custom_call.1} parent=19 // pred_fallthru
          _
        // Predicated region
        $region25: #{tpu_custom_call.1} parent=19 // pred_check
          %p186 = pneg %p98
        $region26: #{tpu_custom_call.1} parent=19 // pred_check_branch
          %188 = sbr.rel (%p186) target = $region28
        $region27: #{tpu_custom_call.1} parent=19 // pred_region
          %s189 = sand.u32 %s14, 1
          %s190 = scalar_lea.sflag [#allocation7], %s189
          %s191 = sand.u32 %s88, 1
          %s192 = smul.addr %s191, 64
          %s193 = scalar_lea.vmem [#allocation8], %s192
          %s194 = smul.u32 16, %s22
          %s196 = ssub.s32 1024, 1024
          %197 = vsyncadd %s190, %s196
          %s198 = smul.addr %s194, 64
          %s199 = scalar_lea.hbm %s2, %s198
          %s200 = sshll.u32 %s193, 4
          %s201 = int_to_ptr.vmem [resolvable:$true] %s200
          %206 = dma.hbm_to_vmem [thread:$0]  %s199, 1024, %s201, %s190, 64, 64, 4
        $region28: #{tpu_custom_call.1} parent=19 // pred_fallthru
          _
      $region20: #{tpu_custom_call.1} parent=5 // pred_fallthru
        _
      %p207 = scmp.le.s32.totalorder 1, %s14
      %p208 = scmp.lt.s32.totalorder %s14, 4
      %p209 = pnand %p207, %p208
      %p210 = pneg %p209
      // Predicated region
      $region29: #{tpu_custom_call.1} parent=5 // pred_check
        _
      $region30: #{tpu_custom_call.1} parent=5 // pred_check_branch
        %212 = sbr.rel (%p209) target = $region32
      $region31: #{tpu_custom_call.1} parent=5 // pred_region
        %s213 = ssub.s32 %s14, 1
        // Predicated region
        $region33: #{tpu_custom_call.1} parent=31 // pred_check
          %p214 = pneg %p52
        $region34: #{tpu_custom_call.1} parent=31 // pred_check_branch
          %216 = sbr.rel (%p214) target = $region36
        $region35: #{tpu_custom_call.1} parent=31 // pred_region
          %217 = dma.done [#allocation4], 128
        $region36: #{tpu_custom_call.1} parent=31 // pred_fallthru
          _
        %s218 = sand.u32 %s19, 1
        %s219 = scalar_lea.sflag [#allocation7], %s218
        %s220 = sand.u32 %s65, 1
        %s221 = smul.addr %s220, 128
        %s222 = scalar_lea.vmem [#allocation6], %s221
        // Predicated region
        $region37: #{tpu_custom_call.1} parent=31 // pred_check
          %p223 = pneg %p78
        $region38: #{tpu_custom_call.1} parent=31 // pred_check_branch
          %225 = sbr.rel (%p223) target = $region40
        $region39: #{tpu_custom_call.1} parent=31 // pred_region
          %226 = dma.done %s219, 2048
        $region40: #{tpu_custom_call.1} parent=31 // pred_fallthru
          _
        %s227 = sand.u32 %s19, 1
        %s228 = scalar_lea.sflag [#allocation7], %s227
        %s229 = sand.u32 %s91, 1
        %s230 = smul.addr %s229, 64
        %s231 = scalar_lea.vmem [#allocation8], %s230
        // Predicated region
        $region41: #{tpu_custom_call.1} parent=31 // pred_check
          %p232 = pneg %p104
        $region42: #{tpu_custom_call.1} parent=31 // pred_check_branch
          %234 = sbr.rel (%p232) target = $region44
        $region43: #{tpu_custom_call.1} parent=31 // pred_region
          %235 = dma.done %s228, 1024
        $region44: #{tpu_custom_call.1} parent=31 // pred_fallthru
          _
        %p236 = pneg %p52
        %p237 = pneg %p49
        %s238 = sand.u32 %s19, 1
        %s239 = scalar_lea.sflag [#allocation7], %s238
        %s240 = sand.u32 %s65, 1
        %s241 = smul.addr %s240, 128
        %s242 = scalar_lea.vmem [#allocation6], %s241
        %p243 = pneg %p78
        %p244 = pneg %p75
        %s245 = sand.u32 %s19, 1
        %s246 = scalar_lea.sflag [#allocation7], %s245
        %s247 = sand.u32 %s91, 1
        %s248 = smul.addr %s247, 64
        %s249 = scalar_lea.vmem [#allocation8], %s248
        %p250 = pneg %p104
        %p251 = pneg %p101
        %p252 = pneg %p130
        %p253 = pneg %p127
        %s254 = smul.u32 2, %s23
        %s255 = smul.u32 16, %s24
        %s256 = smul.u32 2, %s23
        %p258 = scmp.eq.s32.totalorder %s24, 0
        // Predicated region
        $region45: #{tpu_custom_call.1} parent=31 // pred_check
          %p259 = pneg %p258
        $region46: #{tpu_custom_call.1} parent=31 // pred_check_branch
          %261 = sbr.rel (%p259) target = $region48
        $region47: #{tpu_custom_call.1} parent=31 // pred_region
          %262 = vst [vmem:[#allocation2] sm:$0xff] 0.0
          %263 = vst [vmem:[#allocation2 + $0x8] sm:$0xff] 0.0
        $region48: #{tpu_custom_call.1} parent=31 // pred_fallthru
          _
        %v264 = vld [vmem:[#allocation3] sm:$0xf]
        %v265 = vld [vmem:[#allocation3 + $0x4] sm:$0xf]
        %v266 = vld [vmem:[%s222] sm:$0xff]
        %v267 = vld [vmem:[%s222 + $0x8] sm:$0xff]
        %v268 = vld [vmem:[%s222 + $0x10] sm:$0xff]
        %v269 = vld [vmem:[%s222 + $0x18] sm:$0xff]
        %v270 = vld [vmem:[%s222 + $0x20] sm:$0xff]
        %v271 = vld [vmem:[%s222 + $0x28] sm:$0xff]
        %v272 = vld [vmem:[%s222 + $0x30] sm:$0xff]
        %v273 = vld [vmem:[%s222 + $0x38] sm:$0xff]
        %v274 = vld [vmem:[%s222 + $0x40] sm:$0xff]
        %v275 = vld [vmem:[%s222 + $0x48] sm:$0xff]
        %v276 = vld [vmem:[%s222 + $0x50] sm:$0xff]
        %v277 = vld [vmem:[%s222 + $0x58] sm:$0xff]
        %v278 = vld [vmem:[%s222 + $0x60] sm:$0xff]
        %v279 = vld [vmem:[%s222 + $0x68] sm:$0xff]
        %v280 = vld [vmem:[%s222 + $0x70] sm:$0xff]
        %v281 = vld [vmem:[%s222 + $0x78] sm:$0xff]
        %v284 = vunpack.c.l.b16 %v264
        %v285 = vunpack.c.l.b16 %v265
        %v286 = vpack.c.b16 %v285, %v284
        %v304 = vunpack.c.l.b16 %v266
        %v305 = vunpack.c.h.b16 %v266
        %v306 = vunpack.c.l.b16 %v267
        %v307 = vunpack.c.h.b16 %v267
        %v308 = vunpack.c.l.b16 %v268
        %v309 = vunpack.c.h.b16 %v268
        %v310 = vunpack.c.l.b16 %v269
        %v311 = vunpack.c.h.b16 %v269
        %v312 = vunpack.c.l.b16 %v270
        %v313 = vunpack.c.h.b16 %v270
        %v314 = vunpack.c.l.b16 %v271
        %v315 = vunpack.c.h.b16 %v271
        %v316 = vunpack.c.l.b16 %v272
        %v317 = vunpack.c.h.b16 %v272
        %v318 = vunpack.c.l.b16 %v273
        %v319 = vunpack.c.h.b16 %v273
        %v320 = vunpack.c.l.b16 %v274
        %v321 = vunpack.c.h.b16 %v274
        %v322 = vunpack.c.l.b16 %v275
        %v323 = vunpack.c.h.b16 %v275
        %v324 = vunpack.c.l.b16 %v276
        %v325 = vunpack.c.h.b16 %v276
        %v326 = vunpack.c.l.b16 %v277
        %v327 = vunpack.c.h.b16 %v277
        %v328 = vunpack.c.l.b16 %v278
        %v329 = vunpack.c.h.b16 %v278
        %v330 = vunpack.c.l.b16 %v279
        %v331 = vunpack.c.h.b16 %v279
        %v332 = vunpack.c.l.b16 %v280
        %v333 = vunpack.c.h.b16 %v280
        %v334 = vunpack.c.l.b16 %v281
        %v335 = vunpack.c.h.b16 %v281
        %v336 = vpack.c.b16 %v306, %v304
        %v337 = vpack.c.b16 %v307, %v305
        %v338 = vpack.c.b16 %v310, %v308
        %v339 = vpack.c.b16 %v311, %v309
        %v340 = vpack.c.b16 %v314, %v312
        %v341 = vpack.c.b16 %v315, %v313
        %v342 = vpack.c.b16 %v318, %v316
        %v343 = vpack.c.b16 %v319, %v317
        %v344 = vpack.c.b16 %v322, %v320
        %v345 = vpack.c.b16 %v323, %v321
        %v346 = vpack.c.b16 %v326, %v324
        %v347 = vpack.c.b16 %v327, %v325
        %v348 = vpack.c.b16 %v330, %v328
        %v349 = vpack.c.b16 %v331, %v329
        %v350 = vpack.c.b16 %v334, %v332
        %v351 = vpack.c.b16 %v335, %v333
        %368 = vmatprep.subr.bf16.mxu0 %v351
        %369 = vmatpush1.bf16.msra.mxu0 %v350
        %370 = vmatprep.subr.bf16.mxu0 %v349
        %371 = vmatpush1.bf16.msra.mxu0 %v348
        %372 = vmatprep.subr.bf16.mxu0 %v347
        %373 = vmatpush1.bf16.msra.mxu0 %v346
        %374 = vmatprep.subr.bf16.mxu0 %v345
        %375 = vmatpush1.bf16.msra.mxu0 %v344
        %376 = vmatprep.subr.bf16.mxu0 %v343
        %377 = vmatpush1.bf16.msra.mxu0 %v342
        %378 = vmatprep.subr.bf16.mxu0 %v341
        %379 = vmatpush1.bf16.msra.mxu0 %v340
        %380 = vmatprep.subr.bf16.mxu0 %v339
        %381 = vmatpush1.bf16.msra.mxu0 %v338
        %382 = vmatprep.subr.bf16.mxu0 %v337
        %383 = vmatpush1.bf16.msra.mxu0 %v336
        %384 = vmatprep.subr.bf16.mxu0 0
        %385 = vmatpush2.bf16.msra.mxu0 0
        %386 = vmatprep.subr.bf16.mxu0 0
        %387 = vmatpush2.bf16.msra.mxu0 0
        %388 = vmatprep.subr.bf16.mxu0 0
        %389 = vmatpush2.bf16.msra.mxu0 0
        %390 = vmatprep.subr.bf16.mxu0 0
        %391 = vmatpush2.bf16.msra.mxu0 0
        %392 = vmatprep.subr.bf16.mxu0 0
        %393 = vmatpush2.bf16.msra.mxu0 0
        %394 = vmatprep.subr.bf16.mxu0 0
        %395 = vmatpush2.bf16.msra.mxu0 0
        %396 = vmatprep.subr.bf16.mxu0 0
        %397 = vmatpush2.bf16.msra.mxu0 0
        %398 = vmatprep.subr.bf16.mxu0 0
        %399 = vmatpush2.bf16.msra.mxu0 0
        %400 = vmatprep.mubr.bf16.mxu0 0
        %401 = vmatmul.mubr.bf16.gmra.mxu0 %v286
        %v402 = vpop.f32.mrf.mxu0
        %v403 = vadd.f32 0.0, %v402
        %v404 = vpop.f32.mrf.mxu0
        %v405 = vadd.f32 0.0, %v404
        %v406 = vpop.f32.mrf.mxu0
        %v407 = vadd.f32 0.0, %v406
        %v408 = vpop.f32.mrf.mxu0
        %v409 = vadd.f32 0.0, %v408
        %410 = vdwg.mxu0
        %v411 = vxor.u32 %v403, 2147483648
        %v412 = vxor.u32 %v407, 2147483648
        %v413 = vmul.f32 %v411, 1.442695
        %v414 = vpow.pop %v413
        %v415 = vmul.f32 %v412, 1.442695
        %v416 = vpow.pop %v415
        %v417 = vadd.f32 %v414, 1.0
        %v418 = vadd.f32 %v416, 1.0
        %v419 = vrcp.pop %v417
        %v420 = vmul.f32 1.0, %v419
        %v421 = vrcp.pop %v418
        %v422 = vmul.f32 1.0, %v421
        %v423 = vmul.f32 %v403, %v420
        %v424 = vmul.f32 %v407, %v422
        %v425 = vmul.f32 %v423, %v405
        %v426 = vmul.f32 %v424, %v409
        %v427 = vld [vmem:[#allocation2] sm:$0xff]
        %v428 = vld [vmem:[#allocation2 + $0x8] sm:$0xff]
        %v429 = vpack.c.bf16 %v426, %v425
        %v430 = vld [vmem:[%s231] sm:$0xf]
        %v431 = vld [vmem:[%s231 + $0x4] sm:$0xf]
        %v432 = vld [vmem:[%s231 + $0x8] sm:$0xf]
        %v433 = vld [vmem:[%s231 + $0xc] sm:$0xf]
        %v434 = vld [vmem:[%s231 + $0x10] sm:$0xf]
        %v435 = vld [vmem:[%s231 + $0x14] sm:$0xf]
        %v436 = vld [vmem:[%s231 + $0x18] sm:$0xf]
        %v437 = vld [vmem:[%s231 + $0x1c] sm:$0xf]
        %v438 = vld [vmem:[%s231 + $0x20] sm:$0xf]
        %v439 = vld [vmem:[%s231 + $0x24] sm:$0xf]
        %v440 = vld [vmem:[%s231 + $0x28] sm:$0xf]
        %v441 = vld [vmem:[%s231 + $0x2c] sm:$0xf]
        %v442 = vld [vmem:[%s231 + $0x30] sm:$0xf]
        %v443 = vld [vmem:[%s231 + $0x34] sm:$0xf]
        %v444 = vld [vmem:[%s231 + $0x38] sm:$0xf]
        %v445 = vld [vmem:[%s231 + $0x3c] sm:$0xf]
        %v462 = vunpack.c.l.b16 %v430
        %v463 = vunpack.c.l.b16 %v431
        %v464 = vunpack.c.l.b16 %v432
        %v465 = vunpack.c.l.b16 %v433
        %v466 = vunpack.c.l.b16 %v434
        %v467 = vunpack.c.l.b16 %v435
        %v468 = vunpack.c.l.b16 %v436
        %v469 = vunpack.c.l.b16 %v437
        %v470 = vunpack.c.l.b16 %v438
        %v471 = vunpack.c.l.b16 %v439
        %v472 = vunpack.c.l.b16 %v440
        %v473 = vunpack.c.l.b16 %v441
        %v474 = vunpack.c.l.b16 %v442
        %v475 = vunpack.c.l.b16 %v443
        %v476 = vunpack.c.l.b16 %v444
        %v477 = vunpack.c.l.b16 %v445
        %v478 = vpack.c.b16 %v463, %v462
        %v479 = vpack.c.b16 %v465, %v464
        %v480 = vpack.c.b16 %v467, %v466
        %v481 = vpack.c.b16 %v469, %v468
        %v482 = vpack.c.b16 %v471, %v470
        %v483 = vpack.c.b16 %v473, %v472
        %v484 = vpack.c.b16 %v475, %v474
        %v485 = vpack.c.b16 %v477, %v476
        %494 = vmatprep.subr.bf16.mxu0 0
        %495 = vmatpush1.bf16.msra.mxu0 %v485
        %496 = vmatprep.subr.bf16.mxu0 0
        %497 = vmatpush1.bf16.msra.mxu0 %v484
        %498 = vmatprep.subr.bf16.mxu0 0
        %499 = vmatpush1.bf16.msra.mxu0 %v483
        %500 = vmatprep.subr.bf16.mxu0 0
        %501 = vmatpush1.bf16.msra.mxu0 %v482
        %502 = vmatprep.subr.bf16.mxu0 0
        %503 = vmatpush1.bf16.msra.mxu0 %v481
        %504 = vmatprep.subr.bf16.mxu0 0
        %505 = vmatpush1.bf16.msra.mxu0 %v480
        %506 = vmatprep.subr.bf16.mxu0 0
        %507 = vmatpush1.bf16.msra.mxu0 %v479
        %508 = vmatprep.subr.bf16.mxu0 0
        %509 = vmatpush1.bf16.msra.mxu0 %v478
        %510 = vmatprep.subr.bf16.mxu0 0
        %511 = vmatpush2.bf16.msra.mxu0 0
        %512 = vmatprep.subr.bf16.mxu0 0
        %513 = vmatpush2.bf16.msra.mxu0 0
        %514 = vmatprep.subr.bf16.mxu0 0
        %515 = vmatpush2.bf16.msra.mxu0 0
        %516 = vmatprep.subr.bf16.mxu0 0
        %517 = vmatpush2.bf16.msra.mxu0 0
        %518 = vmatprep.subr.bf16.mxu0 0
        %519 = vmatpush2.bf16.msra.mxu0 0
        %520 = vmatprep.subr.bf16.mxu0 0
        %521 = vmatpush2.bf16.msra.mxu0 0
        %522 = vmatprep.subr.bf16.mxu0 0
        %523 = vmatpush2.bf16.msra.mxu0 0
        %524 = vmatprep.subr.bf16.mxu0 0
        %525 = vmatpush2.bf16.msra.mxu0 0
        %526 = vmatprep.mubr.bf16.mxu0 0
        %527 = vmatmul.mubr.bf16.gmra.mxu0 %v429
        %v528 = vpop.f32.mrf.mxu0
        %v529 = vadd.f32 0.0, %v528
        %v530 = vpop.f32.mrf.mxu0
        %v531 = vpop.f32.mrf.mxu0
        %v532 = vadd.f32 0.0, %v531
        %v533 = vpop.f32.mrf.mxu0
        %534 = vdwg.mxu0
        %v535 = vadd.f32 %v427, %v529
        %v536 = vadd.f32 %v428, %v532
        %537 = vst [vmem:[#allocation2] sm:$0xff] %v535
        %538 = vst [vmem:[#allocation2 + $0x8] sm:$0xff] %v536
        %p539 = scmp.eq.s32.totalorder %s24, 2
        // Predicated region
        $region49: #{tpu_custom_call.1} parent=31 // pred_check
          %p540 = pneg %p539
        $region50: #{tpu_custom_call.1} parent=31 // pred_check_branch
          %542 = sbr.rel (%p540) target = $region52
        $region51: #{tpu_custom_call.1} parent=31 // pred_region
          %v543 = vld [vmem:[#allocation2] sm:$0xff]
          %v544 = vld [vmem:[#allocation2 + $0x8] sm:$0xff]
          %545 = vst [vmem:[#allocation9] sm:$0xff] %v543
          %546 = vst [vmem:[#allocation9 + $0x8] sm:$0xff] %v544
        $region52: #{tpu_custom_call.1} parent=31 // pred_fallthru
          _
        // Predicated region
        $region53: #{tpu_custom_call.1} parent=31 // pred_check
          %p547 = pneg %p127
        $region54: #{tpu_custom_call.1} parent=31 // pred_check_branch
          %549 = sbr.rel (%p547) target = $region56
        $region55: #{tpu_custom_call.1} parent=31 // pred_region
          %s550 = smul.u32 2, %s23
          %s552 = ssub.s32 256, 256
          %553 = vsyncadd [#allocation5], %s552
          %s554 = smul.addr %s550, 128
          %s555 = scalar_lea.hbm %s3, %s554
          %s556 = sshll.u32 [#allocation9], 4
          %s557 = int_to_ptr.vmem [resolvable:$true] %s556
          %562 = dma.vmem_to_hbm [thread:$0]  %s557, 256, %s555, [#allocation5], 128, 128, 8
        $region56: #{tpu_custom_call.1} parent=31 // pred_fallthru
          _
        // Predicated region
        $region57: #{tpu_custom_call.1} parent=31 // pred_check
          %p563 = pneg %p127
        $region58: #{tpu_custom_call.1} parent=31 // pred_check_branch
          %565 = sbr.rel (%p563) target = $region60
        $region59: #{tpu_custom_call.1} parent=31 // pred_region
          %566 = dma.done [#allocation5], 256
        $region60: #{tpu_custom_call.1} parent=31 // pred_fallthru
          _
      $region32: #{tpu_custom_call.1} parent=5 // pred_fallthru
        _
      %p567 = scmp.le.s32.totalorder 2, %s14
      // Predicated region
      $region61: #{tpu_custom_call.1} parent=5 // pred_check
        %p568 = pneg %p567
      $region62: #{tpu_custom_call.1} parent=5 // pred_check_branch
        %570 = sbr.rel (%p568) target = $region64
      $region63: #{tpu_custom_call.1} parent=5 // pred_region
        %s571 = ssub.s32 %s14, 2
      $region64: #{tpu_custom_call.1} parent=5 // pred_fallthru
        _
    $region6: #{tpu_custom_call.1} parent=1 // loop_footer
      %s18 = sadd.s32 1, %s14
    $region7: #{tpu_custom_call.1} parent=1 // loop_footer_branch
      %13 = sbr.rel target = $region3
    $region8: #{tpu_custom_call.1} parent=1 // loop_exit
      _
    %572 = vsyncpa [#allocation4], 1
    %s573 = scalar_lea.sflag [#allocation4], 1
    %574 = vsyncpa %s573, 1
    %575 = vsyncpa [#allocation7], 1
    %s576 = scalar_lea.sflag [#allocation7], 1
    %577 = vsyncpa %s576, 1
    %578 = vsyncpa [#allocation5], 1
    %s579 = scalar_lea.sflag [#allocation5], 1
    %580 = vsyncpa %s579, 1

</llo_original>
